<compile_context>
chip_gen: v7x
topology: tpu7x:2x2x1
jax: 0.10.0
libtpu: 0.0.40
codegen_flags: <defaults>
</compile_context>

<pallas_src>
import functools

import jax
import jax.numpy as jnp
from jax import lax
from jax.experimental import pallas as pl
from jax.experimental.pallas import tpu as pltpu

VOCAB_SIZE = 65   # e.g. tiny-Shakespeare char vocab
BLOCK_SIZE = 8

_LANE = 128
_SUBLANE = 8
_MAX_ROW_TILE = 4096                   # rows per grid step (multiple of 8)
_VMEM_LIMIT_BYTES = 48 * 1024 * 1024   # safe on v5e/v6e (128 MiB) and v7x (64 MiB)
_NEG_BIG = -1e30                       # finite -inf stand-in (inf * 0 on MXU -> nan)


def _cdiv(a, b):
    return -(-a // b)


def _round_up(x, m):
    return _cdiv(x, m) * m


def _ce_rows(tt_ref, table_ref, *, n_valid):
    """Per-row logits + per-row cross-entropy for one row tile.

    tt_ref    : (tile_n, 2)     int32 VMEM (col 0 = tokens, col 1 = targets)
    table_ref : (V_pad, V_pad)  f32   VMEM (padded columns pre-masked to -1e30)
    returns   : logits (tile_n, V_pad) f32, per_row loss (tile_n, 1) f32
                (per_row is zero on padded rows, so a plain sum gives the
                 total loss numerator)
    """
    i = pl.program_id(0)
    tile_n = tt_ref.shape[0]
    v_pad = table_ref.shape[1]

    tt = tt_ref[...]
    tok = tt[:, 0:1]                      # (tile_n, 1)
    tgt = tt[:, 1:2]                      # (tile_n, 1)
    col = lax.broadcasted_iota(jnp.int32, (tile_n, v_pad), 1)

    # Exact embedding gather: one-hot(tok) @ table on the MXU (f32 accumulate).
    onehot = (col == tok).astype(jnp.float32)
    logits = jnp.dot(onehot, table_ref[...], preferred_element_type=jnp.float32)

    # Softmax cross entropy over the true vocab: padded classes already carry
    # -1e30 from the table padding, so exp() underflows them to exactly 0.
    m = jnp.max(logits, axis=-1, keepdims=True)
    lse = m + jnp.log(jnp.sum(jnp.exp(logits - m), axis=-1, keepdims=True))
    tgt_logit = jnp.sum(jnp.where(col == tgt, logits, 0.0),
                        axis=-1, keepdims=True)

    # Zero out padded rows so the wrapper-side reduction is a plain sum.
    row = i * tile_n + lax.broadcasted_iota(jnp.int32, (tile_n, 1), 0)
    per_row = jnp.where(row < n_valid, lse - tgt_logit, 0.0)
    return logits, per_row


def _bigram_loss_kernel(tt_ref, table_ref, logits_ref, loss_ref, *, n_valid):
    logits, per_row = _ce_rows(tt_ref, table_ref, n_valid=n_valid)
    logits_ref[...] = logits
    loss_ref[...] = per_row


def _bigram_loss_only_kernel(tt_ref, table_ref, loss_ref, *, n_valid):
    _, per_row = _ce_rows(tt_ref, table_ref, n_valid=n_valid)
    loss_ref[...] = per_row


def _bigram_logits_kernel(tok_ref, table_ref, logits_ref):
    # tok_ref   : (tile_n, 1)     int32 VMEM
    # table_ref : (V_pad, V_pad)  f32   VMEM
    # logits_ref: (tile_n, V_pad) f32   VMEM out (lane-dense)
    tile_n = tok_ref.shape[0]
    v_pad = table_ref.shape[1]
    col = lax.broadcasted_iota(jnp.int32, (tile_n, v_pad), 1)
    onehot = (col == tok_ref[...]).astype(jnp.float32)
    logits_ref[...] = jnp.dot(onehot, table_ref[...],
                              preferred_element_type=jnp.float32)


def bigram_forward(tokens, table, targets=None, *, loss_only=False):
    """Forward pass of BigramModel.

    tokens : (B, T) int32
    table  : (V, V) float32 embedding table
    targets: optional (B, T) int32
    loss_only: with targets, skip the logits output entirely.

    Returns (logits, loss):
      - targets is None               : logits (B, T, V), loss None
      - targets given                 : logits (B*T, V) (torch's .view), scalar loss
      - targets given, loss_only=True : (None, scalar loss)
    """
    B, T = tokens.shape
    V = table.shape[0]
    N = B * T

    # Lane-dense class dimension.
    V_pad = _round_up(max(V, _LANE), _LANE)

    # Balanced row tiles: pick the tile count first so row padding is bounded
    # by < 8 rows per tile instead of up to a whole tile.
    num_tiles = max(1, _cdiv(_round_up(N, _SUBLANE), _MAX_ROW_TILE))
    tile_n = _round_up(_cdiv(N, num_tiles), _SUBLANE)
    n_pad = num_tiles * tile_n
    grid = (num_tiles,)

    # Zero-pad the table to 128 lanes and bake the softmax class mask into the
    # padded columns: the one-hot gather then emits logits that are already
    # masked for the loss (no extra select chain in the kernel).
    table_pad = jnp.pad(table.astype(jnp.float32),
                        ((0, V_pad - V), (0, V_pad - V)))
    if V_pad > V:
        col_is_pad = jnp.arange(V_pad) >= V
        table_pad = jnp.where(col_is_pad[None, :], jnp.float32(_NEG_BIG),
                              table_pad)

    tok_flat = tokens.reshape(-1).astype(jnp.int32)

    table_spec = pl.BlockSpec((V_pad, V_pad), lambda i: (0, 0))
    logits_spec = pl.BlockSpec((tile_n, V_pad), lambda i: (i, 0))
    logits_shape = jax.ShapeDtypeStruct((n_pad, V_pad), jnp.float32)
    cparams = pltpu.CompilerParams(
        dimension_semantics=("parallel",),   # no carried state -> megacore/2-TC OK
        vmem_limit_bytes=_VMEM_LIMIT_BYTES,
    )

    if targets is None:
        tok_in = jnp.pad(tok_flat, (0, n_pad - N)).reshape(n_pad, 1)
        cost = pl.CostEstimate(
            flops=2 * n_pad * V_pad * V_pad,
            transcendentals=0,
            bytes_accessed=4 * (n_pad + V_pad * V_pad + n_pad * V_pad),
        )
        logits_full = pl.pallas_call(
            _bigram_logits_kernel,
            out_shape=logits_shape,
            grid=grid,
            in_specs=[pl.BlockSpec((tile_n, 1), lambda i: (i, 0)), table_spec],
            out_specs=logits_spec,
            compiler_params=cparams,
            cost_estimate=cost,
        )(tok_in, table_pad)
        # NOTE: this slice/reshape is a separate XLA copy kept only to match
        # torch's return shape; consume the padded slab directly if it matters.
        return logits_full[:N, :V].reshape(B, T, V), None

    tgt_flat = targets.reshape(-1).astype(jnp.int32)
    packed = jnp.stack([tok_flat, tgt_flat], axis=-1)      # (N, 2)
    packed = jnp.pad(packed, ((0, n_pad - N), (0, 0)))     # (n_pad, 2)

    tt_spec = pl.BlockSpec((tile_n, 2), lambda i: (i, 0))
    loss_rows_spec = pl.BlockSpec((tile_n, 1), lambda i: (i, 0))
    loss_rows_shape = jax.ShapeDtypeStruct((n_pad, 1), jnp.float32)

    if loss_only:
        kernel = functools.partial(_bigram_loss_only_kernel, n_valid=N)
        cost = pl.CostEstimate(
            flops=2 * n_pad * V_pad * V_pad + 8 * n_pad * V_pad,
            transcendentals=n_pad * V_pad + n_pad,
            bytes_accessed=4 * (2 * n_pad + V_pad * V_pad + n_pad),
        )
        loss_rows = pl.pallas_call(
            kernel,
            out_shape=loss_rows_shape,
            grid=grid,
            in_specs=[tt_spec, table_spec],
            out_specs=loss_rows_spec,
            compiler_params=cparams,
            cost_estimate=cost,
        )(packed, table_pad)
        return None, jnp.sum(loss_rows) / N

    kernel = functools.partial(_bigram_loss_kernel, n_valid=N)
    cost = pl.CostEstimate(
        flops=2 * n_pad * V_pad * V_pad + 8 * n_pad * V_pad,
        transcendentals=n_pad * V_pad + n_pad,
        bytes_accessed=4 * (2 * n_pad + V_pad * V_pad + n_pad * V_pad + n_pad),
    )
    logits_full, loss_rows = pl.pallas_call(
        kernel,
        out_shape=(logits_shape, loss_rows_shape),
        grid=grid,
        in_specs=[tt_spec, table_spec],
        out_specs=(logits_spec, loss_rows_spec),
        compiler_params=cparams,
        cost_estimate=cost,
    )(packed, table_pad)
    loss = jnp.sum(loss_rows) / N
    # NOTE: this slice is a separate XLA copy kept only to match torch's
    # logits.view(B*T, C); use loss_only=True when logits are not consumed.
    return logits_full[:N, :V], loss


if __name__ == "__main__":
    key = jax.random.PRNGKey(0)
    k_table, k_tok, k_tgt = jax.random.split(key, 3)

    B, T, V = 2, BLOCK_SIZE, VOCAB_SIZE

    # nn.Embedding(vocab_size, vocab_size) ~ N(0, 1) init.
    table = jax.random.normal(k_table, (V, V), dtype=jnp.float32)
    tokens = jax.random.randint(k_tok, (B, T), 0, V, dtype=jnp.int32)
    targets = jax.random.randint(k_tgt, (B, T), 0, V, dtype=jnp.int32)

    # With targets: logits (B*T, V), scalar loss.
    logits, loss = bigram_forward(tokens, table, targets)
    jax.block_until_ready((logits, loss))

    # Without targets: logits (B, T, V), loss None.
    logits_nt, loss_nt = bigram_forward(tokens, table, None)
    jax.block_until_ready(logits_nt)

    # Loss-only training-step mode: no logits writeback.
    none_logits, loss_lo = bigram_forward(tokens, table, targets, loss_only=True)
    jax.block_until_ready(loss_lo)

    # Pure-JAX reference check.
    ref_logits = table[tokens.reshape(-1)]
    ref_lse = jax.nn.logsumexp(ref_logits, axis=-1)
    ref_tgt = jnp.take_along_axis(ref_logits, targets.reshape(-1, 1), axis=-1)[:, 0]
    ref_loss = jnp.mean(ref_lse - ref_tgt)

    assert logits.shape == (B * T, V)
    assert logits_nt.shape == (B, T, V)
    assert loss_nt is None
    assert none_logits is None
    assert jnp.allclose(logits, ref_logits, atol=1e-5)
    assert jnp.allclose(logits_nt.reshape(B * T, V), ref_logits, atol=1e-5)
    assert jnp.allclose(loss, ref_loss, atol=1e-5)
    assert jnp.allclose(loss_lo, ref_loss, atol=1e-5)

    print("KERNEL_OK")
</pallas_src>

<mosaic_0001>
module attributes {stable_mosaic.version = 11 : i64} {
  func.func @_bigram_loss_kernel(%arg0: i32, %arg1: memref<16x2xi32, #tpu.memory_space<vmem>>, %arg2: memref<128x128xf32, #tpu.memory_space<vmem>>, %arg3: memref<16x128xf32, #tpu.memory_space<vmem>>, %arg4: memref<16x1xf32, #tpu.memory_space<vmem>>) attributes {dimension_semantics = [#tpu.dimension_semantics<parallel>], iteration_bounds = array<i64: 1>, scalar_prefetch = 0 : i64, scratch_operands = 0 : i64, tpu.core_type = #tpu.core_type<tc>, window_params = [{transform_indices = @transform_0, window_bounds = array<i64: 16, 2>}, {pipeline_mode = #tpu.pipeline_mode<synchronous>, transform_indices = @transform_1, window_bounds = array<i64: 128, 128>}, {transform_indices = @transform_2, window_bounds = array<i64: 16, 128>}, {transform_indices = @transform_3, window_bounds = array<i64: 16, 1>}]} {
    %c0 = arith.constant 0 : index
    %c0_0 = arith.constant 0 : index
    %0 = vector.load %arg1[%c0, %c0_0] : memref<16x2xi32, #tpu.memory_space<vmem>>, vector<16x2xi32>
    %1 = vector.extract_strided_slice %0 {offsets = [0, 0], sizes = [16, 1], strides = [1, 1]} : vector<16x2xi32> to vector<16x1xi32>
    %2 = vector.extract_strided_slice %0 {offsets = [0, 1], sizes = [16, 1], strides = [1, 1]} : vector<16x2xi32> to vector<16x1xi32>
    %3 = tpu.iota {dimensions = array<i32: 1>} : vector<16x128xi32>
    %4 = vector.broadcast %1 : vector<16x1xi32> to vector<16x128xi32>
    %5 = arith.cmpi eq, %3, %4 : vector<16x128xi32>
    %6 = arith.extui %5 : vector<16x128xi1> to vector<16x128xi32>
    %7 = arith.sitofp %6 : vector<16x128xi32> to vector<16x128xf32>
    %c0_1 = arith.constant 0 : index
    %c0_2 = arith.constant 0 : index
    %8 = vector.load %arg2[%c0_1, %c0_2] : memref<128x128xf32, #tpu.memory_space<vmem>>, vector<128x128xf32>
    %cst = arith.constant dense<0.000000e+00> : vector<16x128xf32>
    %9 = tpu.matmul %7, %8, %cst {dimension_numbers = #tpu.dot_dimension_numbers<[1], [0], [0], [1], [0, 0, 1, 1], [], []>} : vector<16x128xf32>, vector<128x128xf32>, vector<16x128xf32> -> vector<16x128xf32>
    %cst_3 = arith.constant dense<0xFF800000> : vector<16xf32>
    %10 = vector.multi_reduction <maximumf>, %9, %cst_3 [1] : vector<16x128xf32> to vector<16xf32>
    %11 = vector.shape_cast %10 : vector<16xf32> to vector<16x1xf32>
    %12 = vector.broadcast %11 : vector<16x1xf32> to vector<16x128xf32>
    %13 = arith.subf %9, %12 : vector<16x128xf32>
    %14 = math.exp %13 : vector<16x128xf32>
    %cst_4 = arith.constant dense<0.000000e+00> : vector<16xf32>
    %15 = vector.multi_reduction <add>, %14, %cst_4 [1] : vector<16x128xf32> to vector<16xf32>
    %16 = vector.shape_cast %15 : vector<16xf32> to vector<16x1xf32>
    %17 = math.log %16 : vector<16x1xf32>
    %18 = arith.addf %11, %17 : vector<16x1xf32>
    %19 = vector.broadcast %2 : vector<16x1xi32> to vector<16x128xi32>
    %20 = arith.cmpi eq, %3, %19 : vector<16x128xi32>
    %cst_5 = arith.constant 0.000000e+00 : f32
    %21 = vector.broadcast %cst_5 : f32 to vector<16x128xf32>
    %22 = arith.select %20, %9, %21 : vector<16x128xi1>, vector<16x128xf32>
    %cst_6 = arith.constant dense<0.000000e+00> : vector<16xf32>
    %23 = vector.multi_reduction <add>, %22, %cst_6 [1] : vector<16x128xf32> to vector<16xf32>
    %24 = vector.shape_cast %23 : vector<16xf32> to vector<16x1xf32>
    %c16_i32 = arith.constant 16 : i32
    %25 = arith.muli %arg0, %c16_i32 : i32
    %26 = tpu.iota {dimensions = array<i32: 0>} : vector<16x1xi32>
    %27 = vector.broadcast %25 : i32 to vector<16x1xi32>
    %28 = arith.addi %27, %26 : vector<16x1xi32>
    %c16_i32_7 = arith.constant 16 : i32
    %29 = vector.broadcast %c16_i32_7 : i32 to vector<16x1xi32>
    %30 = arith.cmpi slt, %28, %29 : vector<16x1xi32>
    %31 = arith.subf %18, %24 : vector<16x1xf32>
    %cst_8 = arith.constant 0.000000e+00 : f32
    %32 = vector.broadcast %cst_8 : f32 to vector<16x1xf32>
    %33 = arith.select %30, %31, %32 : vector<16x1xi1>, vector<16x1xf32>
    %c0_9 = arith.constant 0 : index
    %c0_10 = arith.constant 0 : index
    %34 = vector.load %arg3[%c0_9, %c0_10] : memref<16x128xf32, #tpu.memory_space<vmem>>, vector<16x128xf32>
    tpu.vector_store %arg3[%c0_9, %c0_10], %9 {strides = array<i32>} : memref<16x128xf32, #tpu.memory_space<vmem>>, vector<16x128xf32>,
    %c0_11 = arith.constant 0 : index
    %c0_12 = arith.constant 0 : index
    %35 = vector.load %arg4[%c0_11, %c0_12] : memref<16x1xf32, #tpu.memory_space<vmem>>, vector<16x1xf32>
    tpu.vector_store %arg4[%c0_11, %c0_12], %33 {strides = array<i32>} : memref<16x1xf32, #tpu.memory_space<vmem>>, vector<16x1xf32>,
    return
  }
  func.func @transform_0(%arg0: i32) -> (i32, i32) {
    %c0_i32 = arith.constant 0 : i32
    %c0_i32_0 = arith.constant 0 : i32
    return %arg0, %c0_i32 : i32, i32
  }
  func.func @transform_1(%arg0: i32) -> (i32, i32) {
    %c0_i32 = arith.constant 0 : i32
    %c0_i32_0 = arith.constant 0 : i32
    %c0_i32_1 = arith.constant 0 : i32
    return %c0_i32, %c0_i32_0 : i32, i32
  }
  func.func @transform_2(%arg0: i32) -> (i32, i32) {
    %c0_i32 = arith.constant 0 : i32
    %c0_i32_0 = arith.constant 0 : i32
    return %arg0, %c0_i32 : i32, i32
  }
  func.func @transform_3(%arg0: i32) -> (i32, i32) {
    %c0_i32 = arith.constant 0 : i32
    %c0_i32_0 = arith.constant 0 : i32
    return %arg0, %c0_i32 : i32, i32
  }
}

</mosaic_0001>

<llo_original>
// kernel: tpu_custom_call.1
$region0: #{tpu_custom_call.1}
  #allocation0 [shape = 'u32[]', space=smem, size = 0x4, offset = 0x4, fixed_abs, tag = 'smem constant byte address 0x4 - core index']
  #allocation1 [shape = 'u32[144,128]{1,0:T(1,128)}', space=vmem, size = 0x12000, scoped, tag = 'internal scratch']
  %s0 = inlined_call_operand.vmem [shape: s32[16,2], index: 0, kind: input, shape index: {}]
  %s1 = inlined_call_operand.hbm [shape: f32[128,128], index: 1, kind: input, shape index: {}]
  %s2 = inlined_call_operand.hbm [shape: f32[16,128], index: 2, kind: output, shape index: {0}]
  %s3 = inlined_call_operand.vmem [shape: f32[16,1], index: 3, kind: output, shape index: {1}]
  %4 = xla_tuple %s2, %s3
  %s5 = sld [smem:[#allocation0]]
  $region30: #{tpu_custom_call.1} parent=0
    _
  %s7 = ssub.s32 1, %s5
  %s8 = scalar_select 0, %s7, %s5
  $region1: #{tpu_custom_call.1} parent=0
    #allocation2 [shape = 'u8[65536]{0}', space=vmem, size = 0x10000, scoped, tag = 'input window, operand 1, single buffered']
    #allocation3 [shape = 's32[1]{0}', space=sflag, size = 0x4, scoped, tag = 'scoped memory for tpu_custom_call.1']
    #allocation4 [shape = 's32[1]{0}', space=sflag, size = 0x4, scoped, tag = 'scoped memory for tpu_custom_call.1']
    #allocation5 [shape = 'u8[8192]{0}', space=vmem, size = 0x2000, scoped, tag = 'output window, operand 0, single buffered']
    %9 = vsyncpa [#allocation3], 0
    %10 = vsyncpa [#allocation4], 0
    // Predicated region
    $region2: #{tpu_custom_call.1} parent=1 // pred_check
      _
    $region3: #{tpu_custom_call.1} parent=1 // pred_check_branch
      %12 = sbr.rel (0) target = $region5
    $region4: #{tpu_custom_call.1} parent=1 // pred_region
      _
    $region5: #{tpu_custom_call.1} parent=1 // pred_fallthru
      _
    // Predicated region
    $region6: #{tpu_custom_call.1} parent=1 // pred_check
      _
    $region7: #{tpu_custom_call.1} parent=1 // pred_check_branch
      %14 = sbr.rel (0) target = $region9
    $region8: #{tpu_custom_call.1} parent=1 // pred_region
      %s16 = ssub.s32 2048, 2048
      %17 = vsyncadd [#allocation3], %s16
      %s18 = sshll.u32 [#allocation2], 4
      %s19 = int_to_ptr.vmem [resolvable:$true] %s18
      %24 = dma.hbm_to_vmem [thread:$0]  %s1, 2048, %s19, [#allocation3], 128, 128, 8
    $region9: #{tpu_custom_call.1} parent=1 // pred_fallthru
      _
    // Predicated region
    $region10: #{tpu_custom_call.1} parent=1 // pred_check
      _
    $region11: #{tpu_custom_call.1} parent=1 // pred_check_branch
      %26 = sbr.rel (0) target = $region13
    $region12: #{tpu_custom_call.1} parent=1 // pred_region
      %27 = dma.done [#allocation3], 2048
    $region13: #{tpu_custom_call.1} parent=1 // pred_fallthru
      _
    %v28 = vld [vmem:[%s0] sm:$0xff]
    %v29 = vld [vmem:[%s0 + $0x8] sm:$0xff]
    %v30 = vlaneseq
    %v31 = vand.u32 %v30, 127
    %32 = vset.pattern.permute.xlu0 0
    %33 = vperm.xlu0 %32, %v28
    %v34 = vpop.permute.xlu0 %33
    %35 = vset.pattern.permute.xlu0 0
    %36 = vperm.xlu0 %35, %v29
    %v37 = vpop.permute.xlu0 %36
    %vm38 = vcmp.eq.s32.totalorder %v31, %v34
    %vm39 = vcmp.eq.s32.totalorder %v31, %v37
    %v40 = vsel %vm38, 1, 0
    %v41 = vsel %vm39, 1, 0
    %v42 = vcvt.s32.f32 %v40
    %v43 = vcvt.s32.f32 %v41
    %v44 = vld [vmem:[#allocation2] sm:$0xff]
    %v45 = vld [vmem:[#allocation2 + $0x8] sm:$0xff]
    %v46 = vld [vmem:[#allocation2 + $0x10] sm:$0xff]
    %v47 = vld [vmem:[#allocation2 + $0x18] sm:$0xff]
    %v48 = vld [vmem:[#allocation2 + $0x20] sm:$0xff]
    %v49 = vld [vmem:[#allocation2 + $0x28] sm:$0xff]
    %v50 = vld [vmem:[#allocation2 + $0x30] sm:$0xff]
    %v51 = vld [vmem:[#allocation2 + $0x38] sm:$0xff]
    %v52 = vld [vmem:[#allocation2 + $0x40] sm:$0xff]
    %v53 = vld [vmem:[#allocation2 + $0x48] sm:$0xff]
    %v54 = vld [vmem:[#allocation2 + $0x50] sm:$0xff]
    %v55 = vld [vmem:[#allocation2 + $0x58] sm:$0xff]
    %v56 = vld [vmem:[#allocation2 + $0x60] sm:$0xff]
    %v57 = vld [vmem:[#allocation2 + $0x68] sm:$0xff]
    %v58 = vld [vmem:[#allocation2 + $0x70] sm:$0xff]
    %v59 = vld [vmem:[#allocation2 + $0x78] sm:$0xff]
    %60 = vmatprep.subr.mxu0 0.0
    %61 = vmatpush1.msra.mxu0 %v44
    %62 = vmatprep.subr.mxu0 0.0
    %63 = vmatpush1.msra.mxu0 %v45
    %64 = vmatprep.subr.mxu0 0.0
    %65 = vmatpush1.msra.mxu0 %v46
    %66 = vmatprep.subr.mxu0 0.0
    %67 = vmatpush1.msra.mxu0 %v47
    %68 = vmatprep.subr.mxu0 0.0
    %69 = vmatpush1.msra.mxu0 %v48
    %70 = vmatprep.subr.mxu0 0.0
    %71 = vmatpush1.msra.mxu0 %v49
    %72 = vmatprep.subr.mxu0 0.0
    %73 = vmatpush1.msra.mxu0 %v50
    %74 = vmatprep.subr.mxu0 0.0
    %75 = vmatpush1.msra.mxu0 %v51
    %76 = vmatprep.subr.mxu0 0.0
    %77 = vmatpush1.msra.mxu0 %v52
    %78 = vmatprep.subr.mxu0 0.0
    %79 = vmatpush1.msra.mxu0 %v53
    %80 = vmatprep.subr.mxu0 0.0
    %81 = vmatpush1.msra.mxu0 %v54
    %82 = vmatprep.subr.mxu0 0.0
    %83 = vmatpush1.msra.mxu0 %v55
    %84 = vmatprep.subr.mxu0 0.0
    %85 = vmatpush1.msra.mxu0 %v56
    %86 = vmatprep.subr.mxu0 0.0
    %87 = vmatpush1.msra.mxu0 %v57
    %88 = vmatprep.subr.mxu0 0.0
    %89 = vmatpush1.msra.mxu0 %v58
    %90 = vmatprep.subr.mxu0 0.0
    %91 = vmatpush1.msra.mxu0 %v59
    %92 = vmatprep.subr.mxu0 0.0
    %93 = vmatpush1.msra.mxu0 0.0
    %94 = vmatprep.subr.mxu0 0.0
    %95 = vmatpush1.msra.mxu0 0.0
    %96 = vmatprep.subr.mxu0 0.0
    %97 = vmatpush1.msra.mxu0 0.0
    %98 = vmatprep.subr.mxu0 0.0
    %99 = vmatpush1.msra.mxu0 0.0
    %100 = vmatprep.subr.mxu0 0.0
    %101 = vmatpush1.msra.mxu0 0.0
    %102 = vmatprep.subr.mxu0 0.0
    %103 = vmatpush1.msra.mxu0 0.0
    %104 = vmatprep.subr.mxu0 0.0
    %105 = vmatpush1.msra.mxu0 0.0
    %106 = vmatprep.subr.mxu0 0.0
    %107 = vmatpush1.msra.mxu0 0.0
    %108 = vmatprep.subr.mxu0 0.0
    %109 = vmatpush1.msra.mxu0 0.0
    %110 = vmatprep.subr.mxu0 0.0
    %111 = vmatpush1.msra.mxu0 0.0
    %112 = vmatprep.subr.mxu0 0.0
    %113 = vmatpush1.msra.mxu0 0.0
    %114 = vmatprep.subr.mxu0 0.0
    %115 = vmatpush1.msra.mxu0 0.0
    %116 = vmatprep.subr.mxu0 0.0
    %117 = vmatpush1.msra.mxu0 0.0
    %118 = vmatprep.subr.mxu0 0.0
    %119 = vmatpush1.msra.mxu0 0.0
    %120 = vmatprep.subr.mxu0 0.0
    %121 = vmatpush1.msra.mxu0 0.0
    %122 = vmatprep.subr.mxu0 0.0
    %123 = vmatpush1.msra.mxu0 0.0
    %124 = vmatprep.mubr.f32.mxu0 0.0
    %125 = vmatmul.mubr.f32.gmra.mrb[0].mxu0 %v42
    %v126 = vpop.f32.mrb[0].mxu0
    %v127 = vadd.f32 0.0, %v126
    %v128 = vpop.f32.mrb[0].mxu0
    %129 = vmatprep.mubr.f32.mxu0 0.0
    %130 = vmatmul.mubr.f32.gmra.mrb[0].mxu0 %v43
    %v131 = vpop.f32.mrb[0].mxu0
    %v132 = vadd.f32 0.0, %v131
    %v133 = vpop.f32.mrb[0].mxu0
    %134 = vdwg.mxu0
    %135 = vmax.xlane.f32.xlu0 %v127
    %v136 = vpop.xlane.xlu0 %135
    %137 = vmax.xlane.f32.xlu0 %v132
    %v138 = vpop.xlane.xlu0 %137
    %v139 = vsub.f32 %v127, %v136
    %v140 = vsub.f32 %v132, %v138
    %v141 = vmul.f32 %v139, 1.442695
    %v142 = vpow.pop %v141
    %v143 = vmul.f32 %v140, 1.442695
    %v144 = vpow.pop %v143
    %145 = vadd.xlane.f32.xlu0 %v142
    %v146 = vpop.xlane.xlu0 %145
    %147 = vadd.xlane.f32.xlu0 %v144
    %v148 = vpop.xlane.xlu0 %147
    %v149 = vlog2.pop %v146
    %v150 = vmul.f32 %v149, 0.6931472
    %v151 = vlog2.pop %v148
    %v152 = vmul.f32 %v151, 0.6931472
    %v153 = vadd.f32 %v136, %v150
    %v154 = vadd.f32 %v138, %v152
    %155 = vset.pattern.permute.xlu0 1
    %156 = vperm.xlu0 %155, %v28
    %v157 = vpop.permute.xlu0 %156
    %158 = vset.pattern.permute.xlu0 1
    %159 = vperm.xlu0 %158, %v29
    %v160 = vpop.permute.xlu0 %159
    %vm161 = vcmp.eq.s32.totalorder %v31, %v157
    %vm162 = vcmp.eq.s32.totalorder %v31, %v160
    %v163 = vsel %vm161, %v127, 0.0
    %v164 = vsel %vm162, %v132, 0.0
    %165 = vadd.xlane.f32.xlu0 %v163
    %v166 = vpop.xlane.xlu0 %165
    %167 = vadd.xlane.f32.xlu0 %v164
    %v168 = vpop.xlane.xlu0 %167
    %s169 = smul.u32 0, 16
    %v170 = vlaneseq
    %v171 = vshrl.u32 %v170, 7
    %v172 = vadd.s32 %v171, 8
    %v173 = vstv %s169
    %v174 = vadd.s32 %v173, %v171
    %v175 = vadd.s32 %v173, %v172
    %vm176 = vcmp.lt.s32.totalorder %v174, 16
    %vm177 = vcmp.lt.s32.totalorder %v175, 16
    %v178 = vsub.f32 %v153, %v166
    %v179 = vsub.f32 %v154, %v168
    %v180 = vsel %vm176, %v178, 0.0
    %v181 = vsel %vm177, %v179, 0.0
    %182 = vst [vmem:[#allocation5] sm:$0xff] %v127
    %183 = vst [vmem:[#allocation5 + $0x8] sm:$0xff] %v132
    %vm184 = vcmask 7168
    %185 = vst.msk [vmem:[%s3] sm:$0xff] %vm184, %v180
    %186 = vst.msk [vmem:[%s3 + $0x8] sm:$0xff] %vm184, %v181
    // Predicated region
    $region14: #{tpu_custom_call.1} parent=1 // pred_check
      _
    $region15: #{tpu_custom_call.1} parent=1 // pred_check_branch
      %188 = sbr.rel (0) target = $region17
    $region16: #{tpu_custom_call.1} parent=1 // pred_region
      %s190 = ssub.s32 256, 256
      %191 = vsyncadd [#allocation4], %s190
      %s192 = sshll.u32 [#allocation5], 4
      %s193 = int_to_ptr.vmem [resolvable:$true] %s192
      %198 = dma.vmem_to_hbm [thread:$0]  %s193, 256, %s2, [#allocation4], 128, 128, 8
    $region17: #{tpu_custom_call.1} parent=1 // pred_fallthru
      _
    // Predicated region
    $region18: #{tpu_custom_call.1} parent=1 // pred_check
      _
    $region19: #{tpu_custom_call.1} parent=1 // pred_check_branch
      %200 = sbr.rel (0) target = $region21
    $region20: #{tpu_custom_call.1} parent=1 // pred_region
      _
    $region21: #{tpu_custom_call.1} parent=1 // pred_fallthru
      _
    // Predicated region
    $region22: #{tpu_custom_call.1} parent=1 // pred_check
      _
    $region23: #{tpu_custom_call.1} parent=1 // pred_check_branch
      %202 = sbr.rel (0) target = $region25
    $region24: #{tpu_custom_call.1} parent=1 // pred_region
      %203 = dma.done [#allocation4], 256
    $region25: #{tpu_custom_call.1} parent=1 // pred_fallthru
      _
    // Predicated region
    $region26: #{tpu_custom_call.1} parent=1 // pred_check
      _
    $region27: #{tpu_custom_call.1} parent=1 // pred_check_branch
      %205 = sbr.rel (0) target = $region29
    $region28: #{tpu_custom_call.1} parent=1 // pred_region
      _
    $region29: #{tpu_custom_call.1} parent=1 // pred_fallthru
      _
    %206 = vsyncpa [#allocation3], 1
    %207 = vsyncpa [#allocation4], 1

</llo_original>
